<compile_context>
chip_gen: v6e
topology: v6e:2x2x1
jax: 0.10.0
libtpu: 0.0.40
codegen_flags: <defaults>
</compile_context>

<pallas_src>
import jax
import jax.numpy as jnp
from jax.experimental import pallas as pl
from jax.experimental.pallas import tpu as pltpu


def _intensity_kernel(p_ref, x_ref, o_ref):
    # p_ref : (B_TILE, 3) f32  columns = [gamma, alpha, c] , c = 0.5 - 0.5*alpha + beta
    # x_ref : (B_TILE, D) input slab (lane-dense, D % 128 == 0)
    # o_ref : (B_TILE, D) output slab
    x = x_ref[...].astype(jnp.float32)

    g = p_ref[:, 0:1]          # (B_TILE, 1)
    a = p_ref[:, 1:2]
    c = p_ref[:, 2:3]

    # per-image (per-row) min/max reduction (XLU)
    xmin = jnp.min(x, axis=-1, keepdims=True)
    xmax = jnp.max(x, axis=-1, keepdims=True)
    rng = xmax - xmin

    # one reciprocal per row instead of a per-element divide
    inv_rng = pl.reciprocal(rng + 1e-8, approx=False)
    xn = (x - xmin) * inv_rng

    # gamma correction via exp/log (EUP)
    y = jnp.exp(g * jnp.log(xn + 1e-8))

    # fused contrast + brightness (VPU): alpha*(y-0.5)+0.5+beta == alpha*y + c
    y = a * y + c
    y = jnp.clip(y, 0.0, 1.0)

    # rescale back to the original intensity range
    o_ref[...] = (y * rng + xmin).astype(o_ref.dtype)


def naive_intensity_wrapper(x_in, params):
    """Pallas equivalent of NaiveIntensityWrapper.forward.

    x_in  : (nb, nc, nx, ny) array, or a list of such arrays (concatenated on
            the batch dim, matching torch.cat(dim=0) in forward()).
    params: (nb, 3) float32 per-image [gamma, alpha, beta].
    """
    if isinstance(x_in, (list, tuple)):
        x_in = jnp.concatenate(x_in, axis=0)
    nb, nc, nx, ny = x_in.shape
    assert params.shape == (nb, 3)
    orig_dtype = x_in.dtype

    # ---- lane-dense flattened layout -------------------------------------
    d = nc * nx * ny
    x_flat = x_in.reshape(nb, d)
    d_pad = ((d + 127) // 128) * 128
    if d_pad != d:
        # edge-replicate padding: does not perturb the per-row min/max
        pad = jnp.broadcast_to(x_flat[:, :1], (nb, d_pad - d))
        x_flat = jnp.concatenate([x_flat, pad], axis=1)

    # ---- per-image scalar params (fuse the affine constant) --------------
    gamma = params[:, 0].astype(jnp.float32)
    alpha = params[:, 1].astype(jnp.float32)
    beta = params[:, 2].astype(jnp.float32)
    c = 0.5 - 0.5 * alpha + beta
    p = jnp.stack([gamma, alpha, c], axis=1)                 # (nb, 3) f32

    # ---- batch tiling under a conservative VMEM budget --------------------
    budget_bytes = 1 << 20                                   # ~1 MiB per block
    bytes_per_row = d_pad * 4
    rows = max(1, budget_bytes // bytes_per_row)
    if rows >= nb:
        b_tile = nb                                          # whole batch, grid=(1,)
        nb_pad = nb
    else:
        b_tile = max(8, (rows // 8) * 8)                     # keep (8,...) sublane rule
        nb_pad = ((nb + b_tile - 1) // b_tile) * b_tile

    if nb_pad != nb:
        x_flat = jnp.concatenate(
            [x_flat, jnp.zeros((nb_pad - nb, d_pad), x_flat.dtype)], axis=0)
        p = jnp.concatenate([p, jnp.zeros((nb_pad - nb, 3), p.dtype)], axis=0)

    grid = (nb_pad // b_tile,)

    out = pl.pallas_call(
        _intensity_kernel,
        out_shape=jax.ShapeDtypeStruct((nb_pad, d_pad), orig_dtype),
        grid_spec=pltpu.PrefetchScalarGridSpec(
            num_scalar_prefetch=0,
            grid=grid,
            in_specs=[
                pl.BlockSpec((b_tile, 3), lambda i: (i, 0)),       # params
                pl.BlockSpec((b_tile, d_pad), lambda i: (i, 0)),   # images
            ],
            out_specs=pl.BlockSpec((b_tile, d_pad), lambda i: (i, 0)),
        ),
        compiler_params=pltpu.CompilerParams(
            dimension_semantics=("parallel",)),
    )(p, x_flat)

    return out[:nb, :d].reshape(nb, nc, nx, ny)


def _reference(x, params):
    """Pure-JAX reference of the same per-image transform (for verification)."""
    def one(img, prm):
        g, a, b = prm[0], prm[1], prm[2]
        xmin = jnp.min(img)
        xmax = jnp.max(img)
        rng = xmax - xmin
        xn = (img - xmin) / (rng + 1e-8)
        y = jnp.exp(g * jnp.log(xn + 1e-8))
        y = a * (y - 0.5) + 0.5 + b
        y = jnp.clip(y, 0.0, 1.0)
        return y * rng + xmin
    return jax.vmap(one)(x, params)


if __name__ == "__main__":
    key = jax.random.PRNGKey(0)
    kx, kg, ka, kb = jax.random.split(key, 4)

    nb, nc, nx, ny = 2, 4, 16, 16
    x = jax.random.normal(kx, (nb, nc, nx, ny), dtype=jnp.float32)

    # Deterministic per-image augmentation parameters (gamma, alpha, beta).
    gamma = jax.random.uniform(kg, (nb,), minval=0.8, maxval=1.2)
    alpha = jax.random.uniform(ka, (nb,), minval=0.9, maxval=1.1)
    beta = jax.random.uniform(kb, (nb,), minval=-0.1, maxval=0.1)
    params = jnp.stack([gamma, alpha, beta], axis=1).astype(jnp.float32)

    out = naive_intensity_wrapper(x, params)
    out = jax.block_until_ready(out)
    ref = _reference(x, params)
    assert out.shape == x.shape and out.dtype == x.dtype
    assert jnp.allclose(out, ref, atol=1e-4, rtol=1e-4), "mismatch vs reference"

    # list-input path (matches torch.cat(x_in, dim=0) in the original forward)
    out_list = jax.block_until_ready(
        naive_intensity_wrapper([x[:1], x[1:]], params))
    assert jnp.allclose(out_list, ref, atol=1e-4, rtol=1e-4), "list path mismatch"

    # exercise the lane-padding path (flattened size not a multiple of 128)
    k2, kg2, ka2, kb2 = jax.random.split(jax.random.PRNGKey(1), 4)
    x2 = jax.random.normal(k2, (3, 3, 10, 10), dtype=jnp.float32)
    p2 = jnp.stack([
        jax.random.uniform(kg2, (3,), minval=0.8, maxval=1.2),
        jax.random.uniform(ka2, (3,), minval=0.9, maxval=1.1),
        jax.random.uniform(kb2, (3,), minval=-0.1, maxval=0.1)],
        axis=1).astype(jnp.float32)
    out2 = jax.block_until_ready(naive_intensity_wrapper(x2, p2))
    assert jnp.allclose(out2, _reference(x2, p2), atol=1e-4, rtol=1e-4), \
        "padded path mismatch"

    print("KERNEL_OK")
</pallas_src>

<mosaic_0001>
module attributes {stable_mosaic.version = 11 : i64} {
  func.func @_intensity_kernel(%arg0: i32, %arg1: memref<2x3xf32, #tpu.memory_space<vmem>>, %arg2: memref<2x1024xf32, #tpu.memory_space<vmem>>, %arg3: memref<2x1024xf32, #tpu.memory_space<vmem>>) attributes {dimension_semantics = [#tpu.dimension_semantics<parallel>], iteration_bounds = array<i64: 1>, scalar_prefetch = 0 : i64, scratch_operands = 0 : i64, tpu.core_type = #tpu.core_type<tc>, window_params = [{transform_indices = @transform_0, window_bounds = array<i64: 2, 3>}, {transform_indices = @transform_1, window_bounds = array<i64: 2, 1024>}, {transform_indices = @transform_2, window_bounds = array<i64: 2, 1024>}]} {
    %c0 = arith.constant 0 : index
    %c0_0 = arith.constant 0 : index
    %0 = vector.load %arg2[%c0, %c0_0] : memref<2x1024xf32, #tpu.memory_space<vmem>>, vector<2x1024xf32>
    %c0_1 = arith.constant 0 : index
    %c0_2 = arith.constant 0 : index
    %1 = vector.load %arg1[%c0_1, %c0_2] : memref<2x3xf32, #tpu.memory_space<vmem>>, vector<2x1xf32>
    %c0_3 = arith.constant 0 : index
    %c1 = arith.constant 1 : index
    %2 = vector.load %arg1[%c0_3, %c1] : memref<2x3xf32, #tpu.memory_space<vmem>>, vector<2x1xf32>
    %c0_4 = arith.constant 0 : index
    %c2 = arith.constant 2 : index
    %3 = vector.load %arg1[%c0_4, %c2] : memref<2x3xf32, #tpu.memory_space<vmem>>, vector<2x1xf32>
    %cst = arith.constant dense<0x7F800000> : vector<2xf32>
    %4 = vector.multi_reduction <minimumf>, %0, %cst [1] : vector<2x1024xf32> to vector<2xf32>
    %5 = vector.shape_cast %4 : vector<2xf32> to vector<2x1xf32>
    %cst_5 = arith.constant dense<0xFF800000> : vector<2xf32>
    %6 = vector.multi_reduction <maximumf>, %0, %cst_5 [1] : vector<2x1024xf32> to vector<2xf32>
    %7 = vector.shape_cast %6 : vector<2xf32> to vector<2x1xf32>
    %8 = arith.subf %7, %5 : vector<2x1xf32>
    %cst_6 = arith.constant 9.99999993E-9 : f32
    %9 = vector.broadcast %cst_6 : f32 to vector<2x1xf32>
    %10 = arith.addf %8, %9 : vector<2x1xf32>
    %11 = tpu.reciprocal %10 : vector<2x1xf32> -> vector<2x1xf32>
    %12 = vector.broadcast %5 : vector<2x1xf32> to vector<2x1024xf32>
    %13 = arith.subf %0, %12 : vector<2x1024xf32>
    %14 = vector.broadcast %11 : vector<2x1xf32> to vector<2x1024xf32>
    %15 = arith.mulf %13, %14 : vector<2x1024xf32>
    %cst_7 = arith.constant 9.99999993E-9 : f32
    %16 = vector.broadcast %cst_7 : f32 to vector<2x1024xf32>
    %17 = arith.addf %15, %16 : vector<2x1024xf32>
    %18 = math.log %17 : vector<2x1024xf32>
    %19 = vector.broadcast %1 : vector<2x1xf32> to vector<2x1024xf32>
    %20 = arith.mulf %19, %18 : vector<2x1024xf32>
    %21 = math.exp %20 : vector<2x1024xf32>
    %22 = vector.broadcast %2 : vector<2x1xf32> to vector<2x1024xf32>
    %23 = arith.mulf %22, %21 : vector<2x1024xf32>
    %24 = vector.broadcast %3 : vector<2x1xf32> to vector<2x1024xf32>
    %25 = arith.addf %23, %24 : vector<2x1024xf32>
    %cst_8 = arith.constant 0.000000e+00 : f32
    %cst_9 = arith.constant 1.000000e+00 : f32
    %26 = vector.broadcast %cst_8 : f32 to vector<2x1024xf32>
    %27 = arith.maximumf %26, %25 : vector<2x1024xf32>
    %28 = vector.broadcast %cst_9 : f32 to vector<2x1024xf32>
    %29 = arith.minimumf %28, %27 : vector<2x1024xf32>
    %30 = vector.broadcast %8 : vector<2x1xf32> to vector<2x1024xf32>
    %31 = arith.mulf %29, %30 : vector<2x1024xf32>
    %32 = vector.broadcast %5 : vector<2x1xf32> to vector<2x1024xf32>
    %33 = arith.addf %31, %32 : vector<2x1024xf32>
    %c0_10 = arith.constant 0 : index
    %c0_11 = arith.constant 0 : index
    %34 = vector.load %arg3[%c0_10, %c0_11] : memref<2x1024xf32, #tpu.memory_space<vmem>>, vector<2x1024xf32>
    tpu.vector_store %arg3[%c0_10, %c0_11], %33 {strides = array<i32>} : memref<2x1024xf32, #tpu.memory_space<vmem>>, vector<2x1024xf32>,
    return
  }
  func.func @transform_0(%arg0: i32) -> (i32, i32) {
    %c0_i32 = arith.constant 0 : i32
    %c0_i32_0 = arith.constant 0 : i32
    return %arg0, %c0_i32 : i32, i32
  }
  func.func @transform_1(%arg0: i32) -> (i32, i32) {
    %c0_i32 = arith.constant 0 : i32
    %c0_i32_0 = arith.constant 0 : i32
    return %arg0, %c0_i32 : i32, i32
  }
  func.func @transform_2(%arg0: i32) -> (i32, i32) {
    %c0_i32 = arith.constant 0 : i32
    %c0_i32_0 = arith.constant 0 : i32
    return %arg0, %c0_i32 : i32, i32
  }
}

</mosaic_0001>

<llo_original>
// kernel: tpu_custom_call.1
$region0: #{tpu_custom_call.1}
  #allocation0 [shape = 'u32[]', space=smem, size = 0x4, offset = 0x4, fixed_abs, tag = 'smem constant byte address 0x4 - core index']
  #allocation1 [shape = 'u32[144,128]{1,0:T(1,128)}', space=vmem, size = 0x12000, scoped, tag = 'internal scratch']
  %s0 = inlined_call_operand.hbm [shape: f32[2,3], index: 0, kind: input, shape index: {}]
  %s1 = inlined_call_operand.hbm [shape: f32[2,1024], index: 1, kind: input, shape index: {}]
  %s2 = inlined_call_operand.hbm [shape: f32[2,1024], index: 2, kind: output, shape index: {}]
  %s3 = sld [smem:[#allocation0]]
  $region26: #{tpu_custom_call.1} parent=0
    _
  %s5 = ssub.s32 1, %s3
  %s6 = scalar_select 0, %s5, %s3
  $region1: #{tpu_custom_call.1} parent=0
    #allocation2 [shape = 'u8[1024]{0}', space=vmem, size = 0x400, scoped, tag = 'input window, operand 0, single buffered']
    #allocation3 [shape = 's32[1]{0}', space=sflag, size = 0x4, scoped, tag = 'scoped memory for tpu_custom_call.1']
    #allocation4 [shape = 's32[1]{0}', space=sflag, size = 0x4, scoped, tag = 'scoped memory for tpu_custom_call.1']
    #allocation5 [shape = 'u8[8192]{0}', space=vmem, size = 0x2000, scoped, tag = 'input window, operand 1, single buffered']
    #allocation6 [shape = 's32[1]{0}', space=sflag, size = 0x4, scoped, tag = 'scoped memory for tpu_custom_call.1']
    #allocation7 [shape = 'u8[8192]{0}', space=vmem, size = 0x2000, scoped, tag = 'output window, operand 0, single buffered']
    %7 = vsyncpa [#allocation3], 0
    %8 = vsyncpa [#allocation6], 0
    %9 = vsyncpa [#allocation4], 0
    // Predicated region
    $region2: #{tpu_custom_call.1} parent=1 // pred_check
      _
    $region3: #{tpu_custom_call.1} parent=1 // pred_check_branch
      %11 = sbr.rel (0) target = $region5
    $region4: #{tpu_custom_call.1} parent=1 // pred_region
      %s13 = ssub.s32 32, 32
      %14 = vsyncadd [#allocation3], %s13
      %s16 = sshll.u32 [#allocation2], 4
      %s17 = int_to_ptr.vmem [resolvable:$true] %s16
      %19 = dma.hbm_to_vmem [thread:$0]  %s0, 32, %s17, [#allocation3]
    $region5: #{tpu_custom_call.1} parent=1 // pred_fallthru
      _
    // Predicated region
    $region6: #{tpu_custom_call.1} parent=1 // pred_check
      _
    $region7: #{tpu_custom_call.1} parent=1 // pred_check_branch
      %21 = sbr.rel (0) target = $region9
    $region8: #{tpu_custom_call.1} parent=1 // pred_region
      %s23 = ssub.s32 256, 256
      %24 = vsyncadd [#allocation6], %s23
      %s26 = sshll.u32 [#allocation5], 4
      %s27 = int_to_ptr.vmem [resolvable:$true] %s26
      %29 = dma.hbm_to_vmem [thread:$0]  %s1, 256, %s27, [#allocation6]
    $region9: #{tpu_custom_call.1} parent=1 // pred_fallthru
      _
    // Predicated region
    $region10: #{tpu_custom_call.1} parent=1 // pred_check
      _
    $region11: #{tpu_custom_call.1} parent=1 // pred_check_branch
      %31 = sbr.rel (0) target = $region13
    $region12: #{tpu_custom_call.1} parent=1 // pred_region
      %32 = dma.done [#allocation3], 32
    $region13: #{tpu_custom_call.1} parent=1 // pred_fallthru
      _
    // Predicated region
    $region14: #{tpu_custom_call.1} parent=1 // pred_check
      _
    $region15: #{tpu_custom_call.1} parent=1 // pred_check_branch
      %34 = sbr.rel (0) target = $region17
    $region16: #{tpu_custom_call.1} parent=1 // pred_region
      %35 = dma.done [#allocation6], 256
    $region17: #{tpu_custom_call.1} parent=1 // pred_fallthru
      _
    %v36 = vld [vmem:[#allocation5] sm:$0xff]
    %v37 = vld [vmem:[#allocation5 + $0x8] sm:$0xff]
    %v38 = vld [vmem:[#allocation2] sm:$0x3]
    %v41 = vcombine.high %v36, %v36
    %v43 = vunpack.c.l.s4 1983009808
    %v44 = vunpack.c.0.s8 %v43
    %v45 = vlaneseq
    %v46 = vshrl.u32 %v45, 7
    %v47 = vsub.s32 %v44, %v46
    %v48 = vrot.slane %v36, %v47
    %v50 = vunpack.c.l.s4 1983009808
    %v51 = vunpack.c.0.s8 %v50
    %v52 = vlaneseq
    %v53 = vshrl.u32 %v52, 7
    %v54 = vsub.s32 %v51, %v53
    %v55 = vrot.slane %v41, %v54
    %v56 = vcombine.high %v48, %v48
    %v57 = vcombine.high %v55, %v55
    %v58 = vcombine.high %v37, %v37
    %v60 = vunpack.c.l.s4 1983009808
    %v61 = vunpack.c.0.s8 %v60
    %v62 = vlaneseq
    %v63 = vshrl.u32 %v62, 7
    %v64 = vsub.s32 %v61, %v63
    %v65 = vrot.slane %v37, %v64
    %v67 = vunpack.c.l.s4 1983009808
    %v68 = vunpack.c.0.s8 %v67
    %v69 = vlaneseq
    %v70 = vshrl.u32 %v69, 7
    %v71 = vsub.s32 %v68, %v70
    %v72 = vrot.slane %v58, %v71
    %v73 = vcombine.high %v65, %v65
    %v74 = vcombine.high %v72, %v72
    %vm83 = vcmask 1041408
    %v84 = vsel %vm83, %v48, inf
    %v85 = vsel %vm83, %v56, inf
    %v86 = vsel %vm83, %v55, inf
    %v87 = vsel %vm83, %v57, inf
    %v88 = vsel %vm83, %v65, inf
    %v89 = vmin.f32 %v84, %v88
    %v90 = vsel %vm83, %v73, inf
    %v91 = vmin.f32 %v85, %v90
    %v92 = vsel %vm83, %v72, inf
    %v93 = vmin.f32 %v86, %v92
    %v94 = vsel %vm83, %v74, inf
    %v95 = vmin.f32 %v87, %v94
    %v96 = vmin.f32 %v89, %v91
    %v97 = vmin.f32 %v93, %v95
    %v98 = vmin.f32 %v96, %v97
    %99 = vmin.xlane.f32.xlu0 %v98
    %v100 = vpop.xlane.xlu0 %99
    %v101 = vsel %vm83, %v48, -inf
    %v102 = vsel %vm83, %v56, -inf
    %v103 = vsel %vm83, %v55, -inf
    %v104 = vsel %vm83, %v57, -inf
    %v105 = vsel %vm83, %v65, -inf
    %v106 = vmax.f32 %v101, %v105
    %v107 = vsel %vm83, %v73, -inf
    %v108 = vmax.f32 %v102, %v107
    %v109 = vsel %vm83, %v72, -inf
    %v110 = vmax.f32 %v103, %v109
    %v111 = vsel %vm83, %v74, -inf
    %v112 = vmax.f32 %v104, %v111
    %v113 = vmax.f32 %v106, %v108
    %v114 = vmax.f32 %v110, %v112
    %v115 = vmax.f32 %v113, %v114
    %116 = vmax.xlane.f32.xlu0 %v115
    %v117 = vpop.xlane.xlu0 %116
    %v118 = vsub.f32 %v117, %v100
    %v119 = vadd.f32 %v118, 1e-08
    %v120 = vrcp.pop %v119
    %v123 = vunpack.c.l.s4 269488144
    %v124 = vunpack.c.0.s8 %v123
    %v125 = vlaneseq
    %v126 = vshrl.u32 %v125, 7
    %v127 = vsub.s32 %v124, %v126
    %v128 = vrot.slane %v100, %v127
    %v130 = vsub.f32 %v36, %v128
    %v131 = vsub.f32 %v37, %v128
    %v134 = vunpack.c.l.s4 269488144
    %v135 = vunpack.c.0.s8 %v134
    %v136 = vlaneseq
    %v137 = vshrl.u32 %v136, 7
    %v138 = vsub.s32 %v135, %v137
    %v139 = vrot.slane %v120, %v138
    %v141 = vmul.f32 %v130, %v139
    %v142 = vmul.f32 %v131, %v139
    %v143 = vadd.f32 %v141, 1e-08
    %v144 = vadd.f32 %v142, 1e-08
    %v145 = vlog2.pop %v143
    %v146 = vmul.f32 %v145, 0.6931472
    %v147 = vlog2.pop %v144
    %v148 = vmul.f32 %v147, 0.6931472
    %150 = vset.pattern.permute.xlu0 0
    %151 = vperm.xlu0 %150, %v38
    %v152 = vpop.permute.xlu0 %151
    %v156 = vcombine.high %v146, %v146
    %v158 = vunpack.c.l.s4 1983009808
    %v159 = vunpack.c.0.s8 %v158
    %v160 = vlaneseq
    %v161 = vshrl.u32 %v160, 7
    %v162 = vsub.s32 %v159, %v161
    %v163 = vrot.slane %v146, %v162
    %v165 = vunpack.c.l.s4 1983009808
    %v166 = vunpack.c.0.s8 %v165
    %v167 = vlaneseq
    %v168 = vshrl.u32 %v167, 7
    %v169 = vsub.s32 %v166, %v168
    %v170 = vrot.slane %v156, %v169
    %v171 = vcombine.high %v163, %v163
    %v172 = vcombine.high %v170, %v170
    %v173 = vcombine.high %v148, %v148
    %v175 = vunpack.c.l.s4 1983009808
    %v176 = vunpack.c.0.s8 %v175
    %v177 = vlaneseq
    %v178 = vshrl.u32 %v177, 7
    %v179 = vsub.s32 %v176, %v178
    %v180 = vrot.slane %v148, %v179
    %v182 = vunpack.c.l.s4 1983009808
    %v183 = vunpack.c.0.s8 %v182
    %v184 = vlaneseq
    %v185 = vshrl.u32 %v184, 7
    %v186 = vsub.s32 %v183, %v185
    %v187 = vrot.slane %v173, %v186
    %v188 = vcombine.high %v180, %v180
    %v189 = vcombine.high %v187, %v187
    %v198 = vmul.f32 %v152, %v163
    %v199 = vmul.f32 %v152, %v171
    %v200 = vmul.f32 %v152, %v170
    %v201 = vmul.f32 %v152, %v172
    %v202 = vmul.f32 %v152, %v180
    %v203 = vmul.f32 %v152, %v188
    %v204 = vmul.f32 %v152, %v187
    %v205 = vmul.f32 %v152, %v189
    %v206 = vmul.f32 %v198, 1.442695
    %v207 = vpow.pop %v206
    %v208 = vmul.f32 %v199, 1.442695
    %v209 = vpow.pop %v208
    %v210 = vmul.f32 %v200, 1.442695
    %v211 = vpow.pop %v210
    %v212 = vmul.f32 %v201, 1.442695
    %v213 = vpow.pop %v212
    %v214 = vmul.f32 %v202, 1.442695
    %v215 = vpow.pop %v214
    %v216 = vmul.f32 %v203, 1.442695
    %v217 = vpow.pop %v216
    %v218 = vmul.f32 %v204, 1.442695
    %v219 = vpow.pop %v218
    %v220 = vmul.f32 %v205, 1.442695
    %v221 = vpow.pop %v220
    %222 = vset.pattern.permute.xlu0 1
    %223 = vperm.xlu0 %222, %v38
    %v224 = vpop.permute.xlu0 %223
    %v226 = vmul.f32 %v224, %v207
    %v227 = vmul.f32 %v224, %v209
    %v228 = vmul.f32 %v224, %v211
    %v229 = vmul.f32 %v224, %v213
    %v230 = vmul.f32 %v224, %v215
    %v231 = vmul.f32 %v224, %v217
    %v232 = vmul.f32 %v224, %v219
    %v233 = vmul.f32 %v224, %v221
    %234 = vset.pattern.permute.xlu0 2
    %235 = vperm.xlu0 %234, %v38
    %v236 = vpop.permute.xlu0 %235
    %v238 = vadd.f32 %v226, %v236
    %v239 = vadd.f32 %v227, %v236
    %v240 = vadd.f32 %v228, %v236
    %v241 = vadd.f32 %v229, %v236
    %v242 = vadd.f32 %v230, %v236
    %v243 = vadd.f32 %v231, %v236
    %v244 = vadd.f32 %v232, %v236
    %v245 = vadd.f32 %v233, %v236
    %v246 = vmax.f32 %v238, 0.0
    %v247 = vmax.f32 %v239, 0.0
    %v248 = vmax.f32 %v240, 0.0
    %v249 = vmax.f32 %v241, 0.0
    %v250 = vmax.f32 %v242, 0.0
    %v251 = vmax.f32 %v243, 0.0
    %v252 = vmax.f32 %v244, 0.0
    %v253 = vmax.f32 %v245, 0.0
    %v254 = vmin.f32 %v246, 1.0
    %v255 = vmin.f32 %v247, 1.0
    %v256 = vmin.f32 %v248, 1.0
    %v257 = vmin.f32 %v249, 1.0
    %v258 = vmin.f32 %v250, 1.0
    %v259 = vmin.f32 %v251, 1.0
    %v260 = vmin.f32 %v252, 1.0
    %v261 = vmin.f32 %v253, 1.0
    %v262 = vmul.f32 %v254, %v118
    %v263 = vmul.f32 %v255, %v118
    %v264 = vmul.f32 %v256, %v118
    %v265 = vmul.f32 %v257, %v118
    %v266 = vmul.f32 %v258, %v118
    %v267 = vmul.f32 %v259, %v118
    %v268 = vmul.f32 %v260, %v118
    %v269 = vmul.f32 %v261, %v118
    %v270 = vadd.f32 %v262, %v100
    %v271 = vadd.f32 %v263, %v100
    %v272 = vadd.f32 %v264, %v100
    %v273 = vadd.f32 %v265, %v100
    %v274 = vadd.f32 %v266, %v100
    %v275 = vadd.f32 %v267, %v100
    %v276 = vadd.f32 %v268, %v100
    %v277 = vadd.f32 %v269, %v100
    %v286 = vcombine.low %v270, %v271
    %v287 = vcombine.low %v272, %v273
    %v289 = vunpack.c.l.s4 1983009808
    %v290 = vunpack.c.0.s8 %v289
    %v291 = vlaneseq
    %v292 = vshrl.u32 %v291, 7
    %v293 = vsub.s32 %v290, %v292
    %v294 = vrot.slane %v286, %v293
    %v296 = vunpack.c.l.s4 1983009808
    %v297 = vunpack.c.0.s8 %v296
    %v298 = vlaneseq
    %v299 = vshrl.u32 %v298, 7
    %v300 = vsub.s32 %v297, %v299
    %v301 = vrot.slane %v287, %v300
    %v302 = vcombine.low %v294, %v301
    %v303 = vcombine.low %v274, %v275
    %v304 = vcombine.low %v276, %v277
    %v306 = vunpack.c.l.s4 1983009808
    %v307 = vunpack.c.0.s8 %v306
    %v308 = vlaneseq
    %v309 = vshrl.u32 %v308, 7
    %v310 = vsub.s32 %v307, %v309
    %v311 = vrot.slane %v303, %v310
    %v313 = vunpack.c.l.s4 1983009808
    %v314 = vunpack.c.0.s8 %v313
    %v315 = vlaneseq
    %v316 = vshrl.u32 %v315, 7
    %v317 = vsub.s32 %v314, %v316
    %v318 = vrot.slane %v304, %v317
    %v319 = vcombine.low %v311, %v318
    %322 = vst [vmem:[#allocation7] sm:$0xff] %v302
    %323 = vst [vmem:[#allocation7 + $0x8] sm:$0xff] %v319
    // Predicated region
    $region18: #{tpu_custom_call.1} parent=1 // pred_check
      _
    $region19: #{tpu_custom_call.1} parent=1 // pred_check_branch
      %325 = sbr.rel (0) target = $region21
    $region20: #{tpu_custom_call.1} parent=1 // pred_region
      %s327 = ssub.s32 256, 256
      %328 = vsyncadd [#allocation4], %s327
      %s330 = sshll.u32 [#allocation7], 4
      %s331 = int_to_ptr.vmem [resolvable:$true] %s330
      %333 = dma.vmem_to_hbm [thread:$0]  %s331, 256, %s2, [#allocation4]
    $region21: #{tpu_custom_call.1} parent=1 // pred_fallthru
      _
    // Predicated region
    $region22: #{tpu_custom_call.1} parent=1 // pred_check
      _
    $region23: #{tpu_custom_call.1} parent=1 // pred_check_branch
      %335 = sbr.rel (0) target = $region25
    $region24: #{tpu_custom_call.1} parent=1 // pred_region
      %336 = dma.done [#allocation4], 256
    $region25: #{tpu_custom_call.1} parent=1 // pred_fallthru
      _
    %337 = vsyncpa [#allocation3], 1
    %338 = vsyncpa [#allocation6], 1
    %339 = vsyncpa [#allocation4], 1

</llo_original>
